<compile_context>
chip_gen: v6e
topology: v6e:2x2x1
jax: 0.10.0
libtpu: 0.0.40
codegen_flags: <defaults>
</compile_context>

<pallas_src>
import jax
import jax.numpy as jnp
from jax import lax
from jax.experimental import pallas as pl
from jax.experimental.pallas import tpu as pltpu


def _round_up(x: int, m: int) -> int:
    return ((x + m - 1) // m) * m


def _choose_tile(dim: int, base: int, cap: int):
    """Pick (tile, padded_dim) with tile % base == 0, tile <= cap, padded_dim % tile == 0.

    Pads `dim` only to the alignment `base` when the whole dim fits under the cap;
    otherwise picks the largest tile whose over-padding is <= 12.5% extra work.
    """
    aligned = _round_up(dim, base)
    cap = max(base, (cap // base) * base)
    if aligned <= cap:
        return aligned, aligned
    t = cap
    while t >= base:
        padded = _round_up(aligned, t)
        if (padded - aligned) * 8 <= aligned:  # bounded waste
            return t, padded
        t -= base
    return base, aligned  # unreachable (t == base always has zero waste)


def _vmem_budget_bytes() -> int:
    """~75% of physical VMEM: ~96 MiB on v5e/v6e (128 MiB), ~48 MiB on v7x (64 MiB)."""
    try:
        info = pltpu.get_tpu_info()
        cap = int(getattr(info, "vmem_capacity_bytes", 0))
        if cap > 0:
            return (cap * 3) // 4
    except Exception:
        pass
    return 48 * 1024 * 1024  # safe default on every generation


def _linear_kernel_multi_k(x_ref, w_ref, b_ref, o_ref, acc_ref):
    """acc[i,j] = b[j] + sum_k x[i,k] * w[j,k], accumulated over the K grid axis."""
    k = pl.program_id(2)

    @pl.when(k == 0)
    def _init():
        # Fold bias into the accumulator init: no zero-fill and no epilogue add.
        acc_ref[...] = jnp.broadcast_to(b_ref[...], acc_ref.shape)

    acc_ref[...] += lax.dot_general(
        x_ref[...],
        w_ref[...],
        dimension_numbers=(((1,), (1,)), ((), ())),  # contract K of x with K of (N,K) w
        preferred_element_type=jnp.float32,
    )

    @pl.when(k == pl.num_programs(2) - 1)
    def _finalize():
        o_ref[...] = acc_ref[...].astype(o_ref.dtype)


def _linear_kernel_single_k(x_ref, w_ref, b_ref, o_ref):
    """Single-K-step fast path: no scratch accumulator needed."""
    acc = lax.dot_general(
        x_ref[...],
        w_ref[...],
        dimension_numbers=(((1,), (1,)), ((), ())),
        preferred_element_type=jnp.float32,
    )
    o_ref[...] = (acc + b_ref[...]).astype(o_ref.dtype)


def all_linear(x, weight, bias, *, compute_dtype=None):
    """Pallas implementation of All_Linear.forward: F.linear(x, weight, bias).

    x:      (..., in_channel)
    weight: (out_channel, in_channel)   -- kept in this layout (no transpose)
    bias:   (out_channel,)
    compute_dtype: optional (e.g. jnp.bfloat16) to halve HBM bytes and unlock full
                   MXU rate on v6e/v7x; accumulation stays f32.
    """
    orig_shape = x.shape
    K = orig_shape[-1]
    N, K2 = weight.shape
    assert K == K2, f"in_channel mismatch: {K} vs {K2}"
    out_dtype = x.dtype

    x2d = x.reshape(-1, K)
    M = x2d.shape[0]

    # ---- Effective compute dtype (f32 accumulation always) ----
    cdt = (
        jnp.dtype(compute_dtype)
        if compute_dtype is not None
        else jnp.result_type(x.dtype, weight.dtype)
    )
    x2d = x2d.astype(cdt)
    w = weight.astype(cdt)  # stays (N, K): the MXU consumes the transposed RHS directly

    itemsize = jnp.dtype(cdt).itemsize
    sublane = {4: 8, 2: 16, 1: 32}.get(itemsize, 8)  # from the COMPUTE dtype

    # ---- Generation-aware tile caps / VMEM budget ----
    budget = _vmem_budget_bytes()
    big_vmem = budget >= 80 * 1024 * 1024  # v5e / v6e (128 MiB physical)
    tm_cap = 512
    tn_cap = 1024 if big_vmem else 512
    tk_cap = 2048 if big_vmem else 1024

    tm, M_pad = _choose_tile(M, sublane, tm_cap)
    tn, N_pad = _choose_tile(N, 128, tn_cap)
    tk, K_pad = _choose_tile(K, 128, tk_cap)

    # ---- Alignment padding only (zero-padding is mathematically safe) ----
    if (M_pad, K_pad) != (M, K):
        x2d = jnp.pad(x2d, ((0, M_pad - M), (0, K_pad - K)))
    if (N_pad, K_pad) != (N, K):
        w = jnp.pad(w, ((0, N_pad - N), (0, K_pad - K)))
    b2d = jnp.pad(bias.astype(jnp.float32), (0, N_pad - N)).reshape(1, N_pad)

    m_blocks, n_blocks, k_blocks = M_pad // tm, N_pad // tn, K_pad // tk

    # Put the larger independent axis first so both v7x TensorCores get work for
    # small-M (decode) shapes; no-op on single-TC v5e/v6e. K stays last (reduction).
    if m_blocks >= n_blocks:
        grid = (m_blocks, n_blocks, k_blocks)
        x_map = lambda i, j, k: (i, k)
        w_map = lambda i, j, k: (j, k)
        b_map = lambda i, j, k: (0, j)
        o_map = lambda i, j, k: (i, j)
    else:
        grid = (n_blocks, m_blocks, k_blocks)
        x_map = lambda j, i, k: (i, k)
        w_map = lambda j, i, k: (j, k)
        b_map = lambda j, i, k: (0, j)
        o_map = lambda j, i, k: (i, j)

    if k_blocks == 1:
        kernel = _linear_kernel_single_k
        scratch = []
    else:
        kernel = _linear_kernel_multi_k
        scratch = [pltpu.VMEM((tm, tn), jnp.float32)]

    out_itemsize = jnp.dtype(out_dtype).itemsize
    vmem_est = (
        2 * (tm * tk + tn * tk) * itemsize  # double-buffered x / weight tiles
        + 2 * tn * 4                        # bias tile (f32)
        + 2 * tm * tn * out_itemsize        # double-buffered output tile
        + tm * tn * 4                       # f32 accumulator scratch
    )
    vmem_limit = int(min(budget, max(2 * vmem_est, 32 * 1024 * 1024)))

    cost = pl.CostEstimate(
        flops=2 * M_pad * N_pad * K_pad,
        transcendentals=0,
        bytes_accessed=(M_pad * K_pad + N_pad * K_pad) * itemsize
        + N_pad * 4
        + M_pad * N_pad * out_itemsize,
    )

    out_padded = pl.pallas_call(
        kernel,
        out_shape=jax.ShapeDtypeStruct((M_pad, N_pad), out_dtype),
        grid_spec=pltpu.PrefetchScalarGridSpec(
            num_scalar_prefetch=0,
            grid=grid,
            in_specs=[
                pl.BlockSpec((tm, tk), x_map),  # x tile          (tm, tk)
                pl.BlockSpec((tn, tk), w_map),  # weight tile     (tn, tk), native (N,K)
                pl.BlockSpec((1, tn), b_map),   # bias tile (f32) (1, tn)
            ],
            out_specs=pl.BlockSpec((tm, tn), o_map),
            scratch_shapes=scratch,
        ),
        compiler_params=pltpu.CompilerParams(
            dimension_semantics=("parallel", "parallel", "arbitrary"),
            vmem_limit_bytes=vmem_limit,
        ),
        cost_estimate=cost,
    )(x2d, w, b2d)

    out = out_padded[:M, :N]
    return out.reshape(orig_shape[:-1] + (N,))


if __name__ == "__main__":
    key = jax.random.PRNGKey(0)
    k_x, k_w = jax.random.split(key)

    batch = 8
    in_channel = 32
    out_channel = 64

    # Mirrors the module's __init__: weight = randn(out, in); bias = zeros(out)
    weight = jax.random.normal(k_w, (out_channel, in_channel), dtype=jnp.float32)
    bias = jnp.zeros((out_channel,), dtype=jnp.float32)
    x = jax.random.normal(k_x, (batch, in_channel), dtype=jnp.float32)

    out = all_linear(x, weight, bias)
    out = jax.block_until_ready(out)

    # Reference check (same semantics as F.linear)
    ref = x @ weight.T + bias
    assert out.shape == (batch, out_channel)
    assert jnp.allclose(out, ref, atol=1e-4, rtol=1e-4), float(
        jnp.max(jnp.abs(out - ref))
    )

    print("KERNEL_OK")
</pallas_src>

<mosaic_0001>
module attributes {stable_mosaic.version = 11 : i64} {
  func.func @_linear_kernel_single_k(%arg0: i32, %arg1: i32, %arg2: i32, %arg3: memref<8x128xf32, #tpu.memory_space<vmem>>, %arg4: memref<128x128xf32, #tpu.memory_space<vmem>>, %arg5: memref<1x128xf32, #tpu.memory_space<vmem>>, %arg6: memref<8x128xf32, #tpu.memory_space<vmem>>) attributes {dimension_semantics = [#tpu.dimension_semantics<parallel>, #tpu.dimension_semantics<parallel>, #tpu.dimension_semantics<arbitrary>], iteration_bounds = array<i64: 1, 1, 1>, scalar_prefetch = 0 : i64, scratch_operands = 0 : i64, tpu.core_type = #tpu.core_type<tc>, window_params = [{transform_indices = @transform_0, window_bounds = array<i64: 8, 128>}, {transform_indices = @transform_1, window_bounds = array<i64: 128, 128>}, {transform_indices = @transform_2, window_bounds = array<i64: 1, 128>}, {transform_indices = @transform_3, window_bounds = array<i64: 8, 128>}]} {
    %c0 = arith.constant 0 : index
    %c0_0 = arith.constant 0 : index
    %0 = vector.load %arg3[%c0, %c0_0] : memref<8x128xf32, #tpu.memory_space<vmem>>, vector<8x128xf32>
    %c0_1 = arith.constant 0 : index
    %c0_2 = arith.constant 0 : index
    %1 = vector.load %arg4[%c0_1, %c0_2] : memref<128x128xf32, #tpu.memory_space<vmem>>, vector<128x128xf32>
    %cst = arith.constant dense<0.000000e+00> : vector<8x128xf32>
    %2 = tpu.matmul %0, %1, %cst {dimension_numbers = #tpu.dot_dimension_numbers<[1], [1], [0], [0], [0, 0, 1, 0], [], []>} : vector<8x128xf32>, vector<128x128xf32>, vector<8x128xf32> -> vector<8x128xf32>
    %c0_3 = arith.constant 0 : index
    %c0_4 = arith.constant 0 : index
    %3 = vector.load %arg5[%c0_3, %c0_4] : memref<1x128xf32, #tpu.memory_space<vmem>>, vector<1x128xf32>
    %4 = vector.broadcast %3 : vector<1x128xf32> to vector<8x128xf32>
    %5 = arith.addf %2, %4 : vector<8x128xf32>
    %c0_5 = arith.constant 0 : index
    %c0_6 = arith.constant 0 : index
    %6 = vector.load %arg6[%c0_5, %c0_6] : memref<8x128xf32, #tpu.memory_space<vmem>>, vector<8x128xf32>
    tpu.vector_store %arg6[%c0_5, %c0_6], %5 {strides = array<i32>} : memref<8x128xf32, #tpu.memory_space<vmem>>, vector<8x128xf32>,
    return
  }
  func.func @transform_0(%arg0: i32, %arg1: i32, %arg2: i32) -> (i32, i32) {
    %c0_i32 = arith.constant 0 : i32
    return %arg0, %arg2 : i32, i32
  }
  func.func @transform_1(%arg0: i32, %arg1: i32, %arg2: i32) -> (i32, i32) {
    %c0_i32 = arith.constant 0 : i32
    return %arg1, %arg2 : i32, i32
  }
  func.func @transform_2(%arg0: i32, %arg1: i32, %arg2: i32) -> (i32, i32) {
    %c0_i32 = arith.constant 0 : i32
    %c0_i32_0 = arith.constant 0 : i32
    return %c0_i32, %arg1 : i32, i32
  }
  func.func @transform_3(%arg0: i32, %arg1: i32, %arg2: i32) -> (i32, i32) {
    %c0_i32 = arith.constant 0 : i32
    return %arg0, %arg1 : i32, i32
  }
}

</mosaic_0001>

<llo_original>
// kernel: tpu_custom_call.1
$region0: #{tpu_custom_call.1}
  #allocation0 [shape = 'u32[]', space=smem, size = 0x4, offset = 0x4, fixed_abs, tag = 'smem constant byte address 0x4 - core index']
  #allocation1 [shape = 'u32[144,128]{1,0:T(1,128)}', space=vmem, size = 0x12000, scoped, tag = 'internal scratch']
  %s0 = inlined_call_operand.hbm [shape: f32[8,128], index: 0, kind: input, shape index: {}]
  %s1 = inlined_call_operand.hbm [shape: f32[128,128], index: 1, kind: input, shape index: {}]
  %s2 = inlined_call_operand.vmem [shape: f32[1,128], index: 2, kind: input, shape index: {}]
  %s3 = inlined_call_operand.hbm [shape: f32[8,128], index: 3, kind: output, shape index: {}]
  %s4 = sld [smem:[#allocation0]]
  $region30: #{tpu_custom_call.1} parent=0
    _
  %s6 = ssub.s32 1, %s4
  %s7 = scalar_select 0, %s6, %s4
  $region1: #{tpu_custom_call.1} parent=0
    #allocation2 [shape = 'u8[4096]{0}', space=vmem, size = 0x1000, scoped, tag = 'input window, operand 0, single buffered']
    #allocation3 [shape = 's32[1]{0}', space=sflag, size = 0x4, scoped, tag = 'scoped memory for tpu_custom_call.1']
    #allocation4 [shape = 's32[1]{0}', space=sflag, size = 0x4, scoped, tag = 'scoped memory for tpu_custom_call.1']
    #allocation5 [shape = 'u8[65536]{0}', space=vmem, size = 0x10000, scoped, tag = 'input window, operand 1, single buffered']
    #allocation6 [shape = 's32[1]{0}', space=sflag, size = 0x4, scoped, tag = 'scoped memory for tpu_custom_call.1']
    #allocation7 [shape = 'u8[4096]{0}', space=vmem, size = 0x1000, scoped, tag = 'output window, operand 0, single buffered']
    %8 = vsyncpa [#allocation3], 0
    %9 = vsyncpa [#allocation6], 0
    %10 = vsyncpa [#allocation4], 0
    // Predicated region
    $region2: #{tpu_custom_call.1} parent=1 // pred_check
      _
    $region3: #{tpu_custom_call.1} parent=1 // pred_check_branch
      %12 = sbr.rel (0) target = $region5
    $region4: #{tpu_custom_call.1} parent=1 // pred_region
      %s14 = ssub.s32 128, 128
      %15 = vsyncadd [#allocation3], %s14
      %s17 = sshll.u32 [#allocation2], 4
      %s18 = int_to_ptr.vmem [resolvable:$true] %s17
      %20 = dma.hbm_to_vmem [thread:$0]  %s0, 128, %s18, [#allocation3]
    $region5: #{tpu_custom_call.1} parent=1 // pred_fallthru
      _
    // Predicated region
    $region6: #{tpu_custom_call.1} parent=1 // pred_check
      _
    $region7: #{tpu_custom_call.1} parent=1 // pred_check_branch
      %22 = sbr.rel (0) target = $region9
    $region8: #{tpu_custom_call.1} parent=1 // pred_region
      %s24 = ssub.s32 2048, 2048
      %25 = vsyncadd [#allocation6], %s24
      %s26 = sshll.u32 [#allocation5], 4
      %s27 = int_to_ptr.vmem [resolvable:$true] %s26
      %32 = dma.hbm_to_vmem [thread:$0]  %s1, 2048, %s27, [#allocation6], 128, 128, 8
    $region9: #{tpu_custom_call.1} parent=1 // pred_fallthru
      _
    // Predicated region
    $region10: #{tpu_custom_call.1} parent=1 // pred_check
      _
    $region11: #{tpu_custom_call.1} parent=1 // pred_check_branch
      %34 = sbr.rel (0) target = $region13
    $region12: #{tpu_custom_call.1} parent=1 // pred_region
      _
    $region13: #{tpu_custom_call.1} parent=1 // pred_fallthru
      _
    // Predicated region
    $region14: #{tpu_custom_call.1} parent=1 // pred_check
      _
    $region15: #{tpu_custom_call.1} parent=1 // pred_check_branch
      %36 = sbr.rel (0) target = $region17
    $region16: #{tpu_custom_call.1} parent=1 // pred_region
      %37 = dma.done [#allocation3], 128
    $region17: #{tpu_custom_call.1} parent=1 // pred_fallthru
      _
    // Predicated region
    $region18: #{tpu_custom_call.1} parent=1 // pred_check
      _
    $region19: #{tpu_custom_call.1} parent=1 // pred_check_branch
      %39 = sbr.rel (0) target = $region21
    $region20: #{tpu_custom_call.1} parent=1 // pred_region
      %40 = dma.done [#allocation6], 2048
    $region21: #{tpu_custom_call.1} parent=1 // pred_fallthru
      _
    %v41 = vld [vmem:[#allocation2] sm:$0xff]
    %v42 = vld [vmem:[#allocation5] sm:$0xff]
    %v43 = vld [vmem:[#allocation5 + $0x8] sm:$0xff]
    %v44 = vld [vmem:[#allocation5 + $0x10] sm:$0xff]
    %v45 = vld [vmem:[#allocation5 + $0x18] sm:$0xff]
    %v46 = vld [vmem:[#allocation5 + $0x20] sm:$0xff]
    %v47 = vld [vmem:[#allocation5 + $0x28] sm:$0xff]
    %v48 = vld [vmem:[#allocation5 + $0x30] sm:$0xff]
    %v49 = vld [vmem:[#allocation5 + $0x38] sm:$0xff]
    %v50 = vld [vmem:[#allocation5 + $0x40] sm:$0xff]
    %v51 = vld [vmem:[#allocation5 + $0x48] sm:$0xff]
    %v52 = vld [vmem:[#allocation5 + $0x50] sm:$0xff]
    %v53 = vld [vmem:[#allocation5 + $0x58] sm:$0xff]
    %v54 = vld [vmem:[#allocation5 + $0x60] sm:$0xff]
    %v55 = vld [vmem:[#allocation5 + $0x68] sm:$0xff]
    %v56 = vld [vmem:[#allocation5 + $0x70] sm:$0xff]
    %v57 = vld [vmem:[#allocation5 + $0x78] sm:$0xff]
    %v58 = vld [vmem:[%s2] sm:$0x1]
    %v60 = vlaneseq
    %v61 = vshrl.u32 %v60, 7
    %v62 = vsub.s32 0, %v61
    %v63 = vrot.slane %v58, %v62
    %65 = vmatprep.subr.mxu0 0.0
    %66 = vmatpush1.xpose.msra.mxu0 %v57
    %67 = vmatprep.subr.mxu0 0.0
    %68 = vmatpush1.xpose.msra.mxu0 %v56
    %69 = vmatprep.subr.mxu0 0.0
    %70 = vmatpush1.xpose.msra.mxu0 %v55
    %71 = vmatprep.subr.mxu0 0.0
    %72 = vmatpush1.xpose.msra.mxu0 %v54
    %73 = vmatprep.subr.mxu0 0.0
    %74 = vmatpush1.xpose.msra.mxu0 %v53
    %75 = vmatprep.subr.mxu0 0.0
    %76 = vmatpush1.xpose.msra.mxu0 %v52
    %77 = vmatprep.subr.mxu0 0.0
    %78 = vmatpush1.xpose.msra.mxu0 %v51
    %79 = vmatprep.subr.mxu0 0.0
    %80 = vmatpush1.xpose.msra.mxu0 %v50
    %81 = vmatprep.subr.mxu0 0.0
    %82 = vmatpush1.xpose.msra.mxu0 %v49
    %83 = vmatprep.subr.mxu0 0.0
    %84 = vmatpush1.xpose.msra.mxu0 %v48
    %85 = vmatprep.subr.mxu0 0.0
    %86 = vmatpush1.xpose.msra.mxu0 %v47
    %87 = vmatprep.subr.mxu0 0.0
    %88 = vmatpush1.xpose.msra.mxu0 %v46
    %89 = vmatprep.subr.mxu0 0.0
    %90 = vmatpush1.xpose.msra.mxu0 %v45
    %91 = vmatprep.subr.mxu0 0.0
    %92 = vmatpush1.xpose.msra.mxu0 %v44
    %93 = vmatprep.subr.mxu0 0.0
    %94 = vmatpush1.xpose.msra.mxu0 %v43
    %95 = vmatprep.subr.mxu0 0.0
    %96 = vmatpush1.xpose.msra.mxu0 %v42
    %97 = vmatprep.subr.mxu0 0.0
    %98 = vmatpush2.xpose.msra.mxu0 0.0
    %99 = vmatprep.subr.mxu0 0.0
    %100 = vmatpush2.xpose.msra.mxu0 0.0
    %101 = vmatprep.subr.mxu0 0.0
    %102 = vmatpush2.xpose.msra.mxu0 0.0
    %103 = vmatprep.subr.mxu0 0.0
    %104 = vmatpush2.xpose.msra.mxu0 0.0
    %105 = vmatprep.subr.mxu0 0.0
    %106 = vmatpush2.xpose.msra.mxu0 0.0
    %107 = vmatprep.subr.mxu0 0.0
    %108 = vmatpush2.xpose.msra.mxu0 0.0
    %109 = vmatprep.subr.mxu0 0.0
    %110 = vmatpush2.xpose.msra.mxu0 0.0
    %111 = vmatprep.subr.mxu0 0.0
    %112 = vmatpush2.xpose.msra.mxu0 0.0
    %113 = vmatprep.subr.mxu0 0.0
    %114 = vmatpush2.xpose.msra.mxu0 0.0
    %115 = vmatprep.subr.mxu0 0.0
    %116 = vmatpush2.xpose.msra.mxu0 0.0
    %117 = vmatprep.subr.mxu0 0.0
    %118 = vmatpush2.xpose.msra.mxu0 0.0
    %119 = vmatprep.subr.mxu0 0.0
    %120 = vmatpush2.xpose.msra.mxu0 0.0
    %121 = vmatprep.subr.mxu0 0.0
    %122 = vmatpush2.xpose.msra.mxu0 0.0
    %123 = vmatprep.subr.mxu0 0.0
    %124 = vmatpush2.xpose.msra.mxu0 0.0
    %125 = vmatprep.subr.mxu0 0.0
    %126 = vmatpush2.xpose.msra.mxu0 0.0
    %127 = vmatprep.subr.mxu0 0.0
    %128 = vmatpush2.xpose.msra.mxu0 0.0
    %129 = vmatprep.mubr.f32.mxu0 0.0
    %130 = vmatmul.mubr.f32.gmra.mxu0 %v41
    %v131 = vpop.f32.mrf.mxu0
    %v132 = vadd.f32 %v63, %v131
    %v133 = vpop.f32.mrf.mxu0
    %134 = vdwg.mxu0
    %135 = vst [vmem:[#allocation7] sm:$0xff] %v132
    // Predicated region
    $region22: #{tpu_custom_call.1} parent=1 // pred_check
      _
    $region23: #{tpu_custom_call.1} parent=1 // pred_check_branch
      %137 = sbr.rel (0) target = $region25
    $region24: #{tpu_custom_call.1} parent=1 // pred_region
      %s139 = ssub.s32 128, 128
      %140 = vsyncadd [#allocation4], %s139
      %s142 = sshll.u32 [#allocation7], 4
      %s143 = int_to_ptr.vmem [resolvable:$true] %s142
      %145 = dma.vmem_to_hbm [thread:$0]  %s143, 128, %s3, [#allocation4]
    $region25: #{tpu_custom_call.1} parent=1 // pred_fallthru
      _
    // Predicated region
    $region26: #{tpu_custom_call.1} parent=1 // pred_check
      _
    $region27: #{tpu_custom_call.1} parent=1 // pred_check_branch
      %147 = sbr.rel (0) target = $region29
    $region28: #{tpu_custom_call.1} parent=1 // pred_region
      %148 = dma.done [#allocation4], 128
    $region29: #{tpu_custom_call.1} parent=1 // pred_fallthru
      _
    %149 = vsyncpa [#allocation3], 1
    %150 = vsyncpa [#allocation6], 1
    %151 = vsyncpa [#allocation4], 1

</llo_original>
